<compile_context>
chip_gen: v7x
topology: tpu7x:2x2x1
jax: 0.10.0
libtpu: 0.0.40
codegen_flags: <defaults>
</compile_context>

<pallas_src>
import functools

import jax
import jax.numpy as jnp
from jax.experimental import pallas as pl
from jax.experimental.pallas import tpu as pltpu


_GELU_C = 0.7978845608028654  # sqrt(2/pi)


def _layernorm_f32(x, w, b, eps):
    # PyTorch nn.LayerNorm: biased variance over the last dim, f32 stats.
    mean = jnp.mean(x, axis=-1, keepdims=True)
    var = jnp.mean((x - mean) ** 2, axis=-1, keepdims=True)
    return (x - mean) * jax.lax.rsqrt(var + eps) * w + b


# --------------------------- kernel 1: LN1 + QKV ---------------------------

def qkv_proj_kernel(x_ref, ln1_w_ref, ln1_b_ref, wqkv_ref, bqkv_ref,
                    q_ref, k_ref, v_ref, *, n_heads, head_dim, scale, eps):
    D = n_heads * head_dim
    x = x_ref[...]                                              # (TS, D) f32
    xn = _layernorm_f32(x, ln1_w_ref[...], ln1_b_ref[...], eps)
    qkv = jnp.dot(xn.astype(jnp.bfloat16), wqkv_ref[...],
                  preferred_element_type=jnp.float32) + bqkv_ref[...]  # (TS,3D)
    # One whole-slab XLU transpose: K goes out d-major (hd, S) so kernel 2's
    # QK matmul is a plain batched matmul (no per-KV-tile transpose) and the
    # K store is lane-dense over the sequence axis.
    kt = jnp.transpose(qkv[:, D:2 * D])                         # (D, TS) f32
    for h in range(n_heads):
        lo = h * head_dim
        hi = lo + head_dim
        # attention scale folded into q once here, not per KV step in kernel 2
        q_ref[h] = (qkv[:, lo:hi] * scale).astype(jnp.bfloat16)
        k_ref[h] = kt[lo:hi, :].astype(jnp.bfloat16)            # (hd, TS)
        v_ref[h] = qkv[:, 2 * D + lo:2 * D + hi].astype(jnp.bfloat16)


# ------------- kernel 2: flash attention + proj + LN2 + MLP ----------------

def flash_block_kernel(q_ref, k_ref, v_ref, x_ref,
                       wproj_ref, bproj_ref, ln2_w_ref, ln2_b_ref,
                       w1_ref, b1_ref, w2_ref, b2_ref,
                       o_ref,
                       m_sc, l_sc, acc_sc, wa_sc,
                       *, n_heads, head_dim, eps):
    ki = pl.program_id(2)

    @pl.when(ki == 0)
    def _init():
        m_sc[...] = jnp.full(m_sc.shape, -jnp.inf, jnp.float32)
        l_sc[...] = jnp.zeros(l_sc.shape, jnp.float32)
        acc_sc[...] = jnp.zeros(acc_sc.shape, jnp.float32)

    # ---- flash-attention step over one KV tile (head-batched einsums) ----
    # q is pre-scaled in kernel 1; k is d-major -> plain batched matmul.
    s = jnp.einsum("hqd,hdk->hqk", q_ref[...], k_ref[...],
                   preferred_element_type=jnp.float32)          # (H,TQ,TK) f32
    m_prev = m_sc[...]
    m_new = jnp.maximum(m_prev, jnp.max(s, axis=-1, keepdims=True))
    alpha = jnp.exp(m_prev - m_new)
    # exponent in bf16 (~2x EUP rate on v6e/v7x); p feeds the bf16 PV matmul
    # anyway, while the softmax normalizer is accumulated in f32.
    p = jnp.exp((s - m_new).astype(jnp.bfloat16))               # (H,TQ,TK) bf16
    l_sc[...] = alpha * l_sc[...] + jnp.sum(p, axis=-1, keepdims=True,
                                            dtype=jnp.float32)
    acc_sc[...] = alpha * acc_sc[...] + jnp.einsum(
        "hqk,hkd->hqd", p, v_ref[...], preferred_element_type=jnp.float32)
    m_sc[...] = m_new

    # ---- epilogue on the last KV tile: proj + residual + LN2 + MLP ----
    @pl.when(ki == pl.num_programs(2) - 1)
    def _epilogue():
        inv_l = pl.reciprocal(l_sc[...], approx=True)            # EUP slot
        o_heads = acc_sc[...] * inv_l                            # (H,TQ,hd) f32
        # merge heads into a lane-dense (TQ, D) VMEM slab (once per q tile)
        for h in range(n_heads):
            wa_sc[:, h * head_dim:(h + 1) * head_dim] = o_heads[h]
        wa = wa_sc[...].astype(jnp.bfloat16)                     # (TQ, D)

        attn_out = jnp.dot(wa, wproj_ref[...],
                           preferred_element_type=jnp.float32) + bproj_ref[...]
        x1 = x_ref[...] + attn_out                               # residual, f32

        x2n = _layernorm_f32(x1, ln2_w_ref[...], ln2_b_ref[...], eps)
        h1 = jnp.dot(x2n.astype(jnp.bfloat16), w1_ref[...],
                     preferred_element_type=jnp.float32) + b1_ref[...]
        # tanh-form GELU (EUP); deviation from exact erf-GELU << 1e-3 here
        h1 = 0.5 * h1 * (1.0 + jnp.tanh(_GELU_C * (h1 + 0.044715 * h1 * h1 * h1)))
        h2 = jnp.dot(h1.astype(jnp.bfloat16), w2_ref[...],
                     preferred_element_type=jnp.float32) + b2_ref[...]
        o_ref[...] = (x1 + h2).astype(o_ref.dtype)


# ------------------------------- wrapper -----------------------------------

def _pick_tile(s, target):
    """Largest tile <= target that divides s and keeps sublane alignment."""
    if s <= target:
        return s
    for t in range(target, 0, -1):
        if s % t == 0 and t % 16 == 0:
            return t
    return s


def _nbytes(a):
    return int(a.size) * a.dtype.itemsize


def _vmem_budget_bytes():
    """Generation-aware VMEM ceiling: ~48 MiB on v7x (64 MiB physical),
    ~100 MiB on v5e/v6e (128 MiB physical)."""
    try:
        cap = int(pltpu.get_tpu_info().vmem_capacity_bytes)
    except Exception:
        cap = 128 << 20
    if cap <= (64 << 20):
        return 48 << 20
    return 100 << 20


def _vmem_limit(streamed_bytes, resident_bytes):
    # Only streamed per-tile blocks are double-buffered; resident weights and
    # scratch are counted once.  Headroom for Mosaic internal scratch/spills.
    need = 2 * streamed_bytes + resident_bytes + (12 << 20)
    return int(min(_vmem_budget_bytes(), max(need, 32 << 20)))


def _resident_spec(arr, n_grid_axes):
    """Constant-index weight/bias/LN spec: resident across the grid and
    single-buffered (the default double buffer is pure VMEM waste here)."""
    if n_grid_axes == 2:
        imap = lambda b, si: (0, 0)
    else:
        imap = lambda b, qi, ki: (0, 0)
    try:
        return pl.BlockSpec(arr.shape, imap, pipeline_mode=pl.Buffered(1))
    except TypeError:  # older Pallas without pipeline_mode kwarg
        return pl.BlockSpec(arr.shape, imap)


def block_encoder(x, params, *, n_heads, eps=1e-6, q_tile=512, kv_tile=256):
    B, S, D = x.shape
    head_dim = D // n_heads
    scale = head_dim ** -0.5
    bf = jnp.bfloat16

    TS = _pick_tile(S, q_tile)      # tile for LN1+QKV and for the query rows
    TK = _pick_tile(S, kv_tile)     # KV tile for flash attention
    # v7x megacore: keep >= 2 programs on the "parallel" axes when possible.
    if B * (S // TS) < 2 and TS > 16:
        TS = _pick_tile(S, max(16, TS // 2))
    n_s = S // TS
    n_q = n_s
    n_kv = S // TK

    # Matmul weights in bf16 (f32 accumulation in-kernel); LN params, biases
    # and the residual stream stay f32.
    wqkv = params["wqkv"].astype(bf)
    wproj = params["wproj"].astype(bf)
    w1 = params["w1"].astype(bf)
    w2 = params["w2"].astype(bf)

    # ---------------- kernel 1: LN1 + QKV projection ----------------
    k1 = functools.partial(qkv_proj_kernel, n_heads=n_heads,
                           head_dim=head_dim, scale=scale, eps=eps)
    qv_shape = jax.ShapeDtypeStruct((B, n_heads, S, head_dim), bf)
    kT_shape = jax.ShapeDtypeStruct((B, n_heads, head_dim, S), bf)
    qv_spec = pl.BlockSpec((None, n_heads, TS, head_dim),
                           lambda b, si: (b, 0, si, 0))
    kT_spec = pl.BlockSpec((None, n_heads, head_dim, TS),
                           lambda b, si: (b, 0, 0, si))

    k1_streamed = TS * D * 4 + 3 * (n_heads * TS * head_dim * 2)   # x + q/k/v
    k1_resident = (_nbytes(wqkv) + _nbytes(params["bqkv"])
                   + _nbytes(params["ln1_w"]) + _nbytes(params["ln1_b"]))
    q, k, v = pl.pallas_call(
        k1,
        grid=(B, n_s),
        in_specs=[
            pl.BlockSpec((None, TS, D), lambda b, si: (b, si, 0)),
            _resident_spec(params["ln1_w"], 2),
            _resident_spec(params["ln1_b"], 2),
            _resident_spec(wqkv, 2),
            _resident_spec(params["bqkv"], 2),
        ],
        out_specs=(qv_spec, kT_spec, qv_spec),
        out_shape=(qv_shape, kT_shape, qv_shape),
        compiler_params=pltpu.CompilerParams(
            dimension_semantics=("parallel", "parallel"),
            vmem_limit_bytes=_vmem_limit(k1_streamed, k1_resident)),
    )(x, params["ln1_w"], params["ln1_b"], wqkv, params["bqkv"])

    # ------ kernel 2: flash attention + proj + LN2 + MLP (+ residuals) ------
    k2 = functools.partial(flash_block_kernel, n_heads=n_heads,
                           head_dim=head_dim, eps=eps)
    q_spec = pl.BlockSpec((None, n_heads, TS, head_dim),
                          lambda b, qi, ki: (b, 0, qi, 0))
    k_spec = pl.BlockSpec((None, n_heads, head_dim, TK),
                          lambda b, qi, ki: (b, 0, 0, ki))
    v_spec = pl.BlockSpec((None, n_heads, TK, head_dim),
                          lambda b, qi, ki: (b, 0, ki, 0))
    xq_spec = pl.BlockSpec((None, TS, D), lambda b, qi, ki: (b, qi, 0))

    k2_streamed = (n_heads * TS * head_dim * 2          # q tile (bf16)
                   + 2 * n_heads * TK * head_dim * 2    # k, v tiles (bf16)
                   + TS * D * 4                         # x tile (f32)
                   + TS * D * 4)                        # out tile (f32)
    k2_resident = (_nbytes(wproj) + _nbytes(w1) + _nbytes(w2)
                   + _nbytes(params["bproj"]) + _nbytes(params["b1"])
                   + _nbytes(params["b2"])
                   + _nbytes(params["ln2_w"]) + _nbytes(params["ln2_b"])
                   + 2 * n_heads * TS * 4               # m, l scratch
                   + n_heads * TS * head_dim * 4        # flash acc
                   + TS * D * 4)                        # head-merge slab
    out = pl.pallas_call(
        k2,
        grid=(B, n_q, n_kv),
        in_specs=[
            q_spec, k_spec, v_spec, xq_spec,
            _resident_spec(wproj, 3), _resident_spec(params["bproj"], 3),
            _resident_spec(params["ln2_w"], 3), _resident_spec(params["ln2_b"], 3),
            _resident_spec(w1, 3), _resident_spec(params["b1"], 3),
            _resident_spec(w2, 3), _resident_spec(params["b2"], 3),
        ],
        out_specs=xq_spec,
        out_shape=jax.ShapeDtypeStruct((B, S, D), jnp.float32),
        scratch_shapes=[
            pltpu.VMEM((n_heads, TS, 1), jnp.float32),           # running max
            pltpu.VMEM((n_heads, TS, 1), jnp.float32),           # running sum
            pltpu.VMEM((n_heads, TS, head_dim), jnp.float32),    # flash acc
            pltpu.VMEM((TS, D), jnp.float32),                    # head-merge slab
        ],
        compiler_params=pltpu.CompilerParams(
            dimension_semantics=("parallel", "parallel", "arbitrary"),
            vmem_limit_bytes=_vmem_limit(k2_streamed, k2_resident)),
    )(q, k, v, x, wproj, params["bproj"], params["ln2_w"], params["ln2_b"],
      w1, params["b1"], w2, params["b2"])
    return out


# --------------------------- params & reference ----------------------------

def make_params(key, dim, n_heads, mlp_ratio=4):
    hidden = int(dim * mlp_ratio)
    ks = jax.random.split(key, 12)
    n = lambda k, shp, s=0.02: s * jax.random.normal(k, shp, jnp.float32)
    # Linear weights stored as (in, out) == PyTorch weight.T ; biases as (1, out).
    return {
        "ln1_w": 1.0 + n(ks[0], (1, dim), 0.1),
        "ln1_b": n(ks[1], (1, dim), 0.1),
        "wqkv": n(ks[2], (dim, 3 * dim)),
        "bqkv": n(ks[3], (1, 3 * dim)),
        "wproj": n(ks[4], (dim, dim)),
        "bproj": n(ks[5], (1, dim)),
        "ln2_w": 1.0 + n(ks[6], (1, dim), 0.1),
        "ln2_b": n(ks[7], (1, dim), 0.1),
        "w1": n(ks[8], (dim, hidden)),
        "b1": n(ks[9], (1, hidden)),
        "w2": n(ks[10], (hidden, dim)),
        "b2": n(ks[11], (1, dim)),
    }


def reference(x, params, n_heads, eps=1e-6):
    # Pure-JAX (f32, exact-erf GELU) transcription of the PyTorch forward.
    B, S, D = x.shape
    hd = D // n_heads

    def ln(y, w, b):
        m = jnp.mean(y, -1, keepdims=True)
        v = jnp.mean((y - m) ** 2, -1, keepdims=True)
        return (y - m) / jnp.sqrt(v + eps) * w + b

    xn = ln(x, params["ln1_w"][0], params["ln1_b"][0])
    qkv = xn @ params["wqkv"] + params["bqkv"][0]
    qkv = qkv.reshape(B, S, 3, n_heads, hd).transpose(2, 0, 3, 1, 4)
    q, k, v = qkv[0], qkv[1], qkv[2]
    dp = jnp.einsum("bhqd,bhkd->bhqk", q, k) * hd ** -0.5
    attn = jax.nn.softmax(dp, axis=-1)
    wa = jnp.einsum("bhqk,bhkd->bhqd", attn, v)
    wa = wa.transpose(0, 2, 1, 3).reshape(B, S, D)
    x1 = x + wa @ params["wproj"] + params["bproj"][0]

    x2n = ln(x1, params["ln2_w"][0], params["ln2_b"][0])
    h1 = x2n @ params["w1"] + params["b1"][0]
    h1 = 0.5 * h1 * (1.0 + jax.scipy.special.erf(h1 / jnp.sqrt(2.0)))
    return x1 + h1 @ params["w2"] + params["b2"][0]


if __name__ == "__main__":
    B, S, D = 2, 8, 32          # batch, tokens, embed dim
    N_HEADS = 4                 # head_dim = 8
    key = jax.random.PRNGKey(0)
    kx, kp = jax.random.split(key)
    x = jax.random.normal(kx, (B, S, D), jnp.float32)
    params = make_params(kp, D, N_HEADS)

    out = block_encoder(x, params, n_heads=N_HEADS)
    out = jax.block_until_ready(out)

    ref = reference(x, params, N_HEADS)
    max_err = float(jnp.max(jnp.abs(out - ref)))
    # bf16 matmul inputs (f32 accumulation) + bf16 exp + approx reciprocal
    # + tanh-GELU
    assert max_err < 1e-2, f"mismatch vs reference: max abs err = {max_err}"
    print("KERNEL_OK")
</pallas_src>

<mosaic_0001>
module attributes {stable_mosaic.version = 11 : i64} {
  func.func @qkv_proj_kernel(%arg0: i32, %arg1: i32, %arg2: memref<1x8x32xf32, #tpu.memory_space<vmem>>, %arg3: memref<1x32xf32, #tpu.memory_space<vmem>>, %arg4: memref<1x32xf32, #tpu.memory_space<vmem>>, %arg5: memref<32x96xbf16, #tpu.memory_space<vmem>>, %arg6: memref<1x96xf32, #tpu.memory_space<vmem>>, %arg7: memref<1x4x8x8xbf16, #tpu.memory_space<vmem>>, %arg8: memref<1x4x8x8xbf16, #tpu.memory_space<vmem>>, %arg9: memref<1x4x8x8xbf16, #tpu.memory_space<vmem>>) attributes {dimension_semantics = [#tpu.dimension_semantics<parallel>, #tpu.dimension_semantics<parallel>], iteration_bounds = array<i64: 2, 1>, scalar_prefetch = 0 : i64, scratch_operands = 0 : i64, tpu.core_type = #tpu.core_type<tc>, window_params = [{transform_indices = @transform_0, window_bounds = array<i64: 1, 8, 32>}, {pipeline_mode = #tpu.pipeline_mode<synchronous>, transform_indices = @transform_1, window_bounds = array<i64: 1, 32>}, {pipeline_mode = #tpu.pipeline_mode<synchronous>, transform_indices = @transform_2, window_bounds = array<i64: 1, 32>}, {pipeline_mode = #tpu.pipeline_mode<synchronous>, transform_indices = @transform_3, window_bounds = array<i64: 32, 96>}, {pipeline_mode = #tpu.pipeline_mode<synchronous>, transform_indices = @transform_4, window_bounds = array<i64: 1, 96>}, {transform_indices = @transform_5, window_bounds = array<i64: 1, 4, 8, 8>}, {transform_indices = @transform_6, window_bounds = array<i64: 1, 4, 8, 8>}, {transform_indices = @transform_7, window_bounds = array<i64: 1, 4, 8, 8>}]} {
    %c0 = arith.constant 0 : index
    %c0_0 = arith.constant 0 : index
    %c0_1 = arith.constant 0 : index
    %0 = vector.load %arg2[%c0, %c0_0, %c0_1] : memref<1x8x32xf32, #tpu.memory_space<vmem>>, vector<1x8x32xf32>
    %1 = vector.shape_cast %0 : vector<1x8x32xf32> to vector<8x32xf32>
    %c0_2 = arith.constant 0 : index
    %c0_3 = arith.constant 0 : index
    %2 = vector.load %arg3[%c0_2, %c0_3] : memref<1x32xf32, #tpu.memory_space<vmem>>, vector<1x32xf32>
    %c0_4 = arith.constant 0 : index
    %c0_5 = arith.constant 0 : index
    %3 = vector.load %arg4[%c0_4, %c0_5] : memref<1x32xf32, #tpu.memory_space<vmem>>, vector<1x32xf32>
    %cst = arith.constant dense<0.000000e+00> : vector<8xf32>
    %4 = vector.multi_reduction <add>, %1, %cst [1] : vector<8x32xf32> to vector<8xf32>
    %5 = vector.shape_cast %4 : vector<8xf32> to vector<8x1xf32>
    %cst_6 = arith.constant 3.200000e+01 : f32
    %6 = vector.broadcast %cst_6 : f32 to vector<8x1xf32>
    %7 = arith.divf %5, %6 : vector<8x1xf32>
    %8 = vector.broadcast %7 : vector<8x1xf32> to vector<8x32xf32>
    %9 = arith.subf %1, %8 : vector<8x32xf32>
    %10 = arith.mulf %9, %9 : vector<8x32xf32>
    %cst_7 = arith.constant dense<0.000000e+00> : vector<8xf32>
    %11 = vector.multi_reduction <add>, %10, %cst_7 [1] : vector<8x32xf32> to vector<8xf32>
    %12 = vector.shape_cast %11 : vector<8xf32> to vector<8x1xf32>
    %cst_8 = arith.constant 3.200000e+01 : f32
    %13 = vector.broadcast %cst_8 : f32 to vector<8x1xf32>
    %14 = arith.divf %12, %13 : vector<8x1xf32>
    %15 = vector.broadcast %7 : vector<8x1xf32> to vector<8x32xf32>
    %16 = arith.subf %1, %15 : vector<8x32xf32>
    %cst_9 = arith.constant 9.99999997E-7 : f32
    %17 = vector.broadcast %cst_9 : f32 to vector<8x1xf32>
    %18 = arith.addf %14, %17 : vector<8x1xf32>
    %19 = math.rsqrt %18 : vector<8x1xf32>
    %20 = vector.broadcast %19 : vector<8x1xf32> to vector<8x32xf32>
    %21 = arith.mulf %16, %20 : vector<8x32xf32>
    %22 = vector.broadcast %2 : vector<1x32xf32> to vector<8x32xf32>
    %23 = arith.mulf %21, %22 : vector<8x32xf32>
    %24 = vector.broadcast %3 : vector<1x32xf32> to vector<8x32xf32>
    %25 = arith.addf %23, %24 : vector<8x32xf32>
    %26 = arith.truncf %25 : vector<8x32xf32> to vector<8x32xbf16>
    %c0_10 = arith.constant 0 : index
    %c0_11 = arith.constant 0 : index
    %27 = vector.load %arg5[%c0_10, %c0_11] : memref<32x96xbf16, #tpu.memory_space<vmem>>, vector<32x96xbf16>
    %cst_12 = arith.constant dense<0.000000e+00> : vector<8x96xf32>
    %28 = tpu.matmul %26, %27, %cst_12 {dimension_numbers = #tpu.dot_dimension_numbers<[1], [0], [0], [1], [0, 0, 1, 1], [], []>} : vector<8x32xbf16>, vector<32x96xbf16>, vector<8x96xf32> -> vector<8x96xf32>
    %c0_13 = arith.constant 0 : index
    %c0_14 = arith.constant 0 : index
    %29 = vector.load %arg6[%c0_13, %c0_14] : memref<1x96xf32, #tpu.memory_space<vmem>>, vector<1x96xf32>
    %30 = vector.broadcast %29 : vector<1x96xf32> to vector<8x96xf32>
    %31 = arith.addf %28, %30 : vector<8x96xf32>
    %32 = vector.extract_strided_slice %31 {offsets = [0, 32], sizes = [8, 32], strides = [1, 1]} : vector<8x96xf32> to vector<8x32xf32>
    %33 = tpu.transpose %32, [1, 0] : vector<8x32xf32> -> vector<32x8xf32>
    %34 = vector.extract_strided_slice %31 {offsets = [0, 0], sizes = [8, 8], strides = [1, 1]} : vector<8x96xf32> to vector<8x8xf32>
    %cst_15 = arith.constant 0.353553385 : f32
    %35 = vector.broadcast %cst_15 : f32 to vector<8x8xf32>
    %36 = arith.mulf %34, %35 : vector<8x8xf32>
    %37 = arith.truncf %36 : vector<8x8xf32> to vector<8x8xbf16>
    %c0_16 = arith.constant 0 : index
    %c0_17 = arith.constant 0 : index
    %c0_18 = arith.constant 0 : index
    %c0_19 = arith.constant 0 : index
    %38 = vector.load %arg7[%c0_16, %c0_17, %c0_18, %c0_19] : memref<1x4x8x8xbf16, #tpu.memory_space<vmem>>, vector<1x1x8x8xbf16>
    %39 = vector.shape_cast %38 : vector<1x1x8x8xbf16> to vector<8x8xbf16>
    %40 = vector.shape_cast %37 : vector<8x8xbf16> to vector<1x1x8x8xbf16>
    tpu.vector_store %arg7[%c0_16, %c0_17, %c0_18, %c0_19], %40 {strides = array<i32>} : memref<1x4x8x8xbf16, #tpu.memory_space<vmem>>, vector<1x1x8x8xbf16>,
    %41 = vector.extract_strided_slice %33 {offsets = [0, 0], sizes = [8, 8], strides = [1, 1]} : vector<32x8xf32> to vector<8x8xf32>
    %42 = arith.truncf %41 : vector<8x8xf32> to vector<8x8xbf16>
    %c0_20 = arith.constant 0 : index
    %c0_21 = arith.constant 0 : index
    %c0_22 = arith.constant 0 : index
    %c0_23 = arith.constant 0 : index
    %43 = vector.load %arg8[%c0_20, %c0_21, %c0_22, %c0_23] : memref<1x4x8x8xbf16, #tpu.memory_space<vmem>>, vector<1x1x8x8xbf16>
    %44 = vector.shape_cast %43 : vector<1x1x8x8xbf16> to vector<8x8xbf16>
    %45 = vector.shape_cast %42 : vector<8x8xbf16> to vector<1x1x8x8xbf16>
    tpu.vector_store %arg8[%c0_20, %c0_21, %c0_22, %c0_23], %45 {strides = array<i32>} : memref<1x4x8x8xbf16, #tpu.memory_space<vmem>>, vector<1x1x8x8xbf16>,
    %46 = vector.extract_strided_slice %31 {offsets = [0, 64], sizes = [8, 8], strides = [1, 1]} : vector<8x96xf32> to vector<8x8xf32>
    %47 = arith.truncf %46 : vector<8x8xf32> to vector<8x8xbf16>
    %c0_24 = arith.constant 0 : index
    %c0_25 = arith.constant 0 : index
    %c0_26 = arith.constant 0 : index
    %c0_27 = arith.constant 0 : index
    %48 = vector.load %arg9[%c0_24, %c0_25, %c0_26, %c0_27] : memref<1x4x8x8xbf16, #tpu.memory_space<vmem>>, vector<1x1x8x8xbf16>
    %49 = vector.shape_cast %48 : vector<1x1x8x8xbf16> to vector<8x8xbf16>
    %50 = vector.shape_cast %47 : vector<8x8xbf16> to vector<1x1x8x8xbf16>
    tpu.vector_store %arg9[%c0_24, %c0_25, %c0_26, %c0_27], %50 {strides = array<i32>} : memref<1x4x8x8xbf16, #tpu.memory_space<vmem>>, vector<1x1x8x8xbf16>,
    %51 = vector.extract_strided_slice %31 {offsets = [0, 8], sizes = [8, 8], strides = [1, 1]} : vector<8x96xf32> to vector<8x8xf32>
    %cst_28 = arith.constant 0.353553385 : f32
    %52 = vector.broadcast %cst_28 : f32 to vector<8x8xf32>
    %53 = arith.mulf %51, %52 : vector<8x8xf32>
    %54 = arith.truncf %53 : vector<8x8xf32> to vector<8x8xbf16>
    %c0_29 = arith.constant 0 : index
    %c1 = arith.constant 1 : index
    %c0_30 = arith.constant 0 : index
    %c0_31 = arith.constant 0 : index
    %55 = vector.load %arg7[%c0_29, %c1, %c0_30, %c0_31] : memref<1x4x8x8xbf16, #tpu.memory_space<vmem>>, vector<1x1x8x8xbf16>
    %56 = vector.shape_cast %55 : vector<1x1x8x8xbf16> to vector<8x8xbf16>
    %57 = vector.shape_cast %54 : vector<8x8xbf16> to vector<1x1x8x8xbf16>
    tpu.vector_store %arg7[%c0_29, %c1, %c0_30, %c0_31], %57 {strides = array<i32>} : memref<1x4x8x8xbf16, #tpu.memory_space<vmem>>, vector<1x1x8x8xbf16>,
    %58 = vector.extract_strided_slice %33 {offsets = [8, 0], sizes = [8, 8], strides = [1, 1]} : vector<32x8xf32> to vector<8x8xf32>
    %59 = arith.truncf %58 : vector<8x8xf32> to vector<8x8xbf16>
    %c0_32 = arith.constant 0 : index
    %c1_33 = arith.constant 1 : index
    %c0_34 = arith.constant 0 : index
    %c0_35 = arith.constant 0 : index
    %60 = vector.load %arg8[%c0_32, %c1_33, %c0_34, %c0_35] : memref<1x4x8x8xbf16, #tpu.memory_space<vmem>>, vector<1x1x8x8xbf16>
    %61 = vector.shape_cast %60 : vector<1x1x8x8xbf16> to vector<8x8xbf16>
    %62 = vector.shape_cast %59 : vector<8x8xbf16> to vector<1x1x8x8xbf16>
    tpu.vector_store %arg8[%c0_32, %c1_33, %c0_34, %c0_35], %62 {strides = array<i32>} : memref<1x4x8x8xbf16, #tpu.memory_space<vmem>>, vector<1x1x8x8xbf16>,
    %63 = vector.extract_strided_slice %31 {offsets = [0, 72], sizes = [8, 8], strides = [1, 1]} : vector<8x96xf32> to vector<8x8xf32>
    %64 = arith.truncf %63 : vector<8x8xf32> to vector<8x8xbf16>
    %c0_36 = arith.constant 0 : index
    %c1_37 = arith.constant 1 : index
    %c0_38 = arith.constant 0 : index
    %c0_39 = arith.constant 0 : index
    %65 = vector.load %arg9[%c0_36, %c1_37, %c0_38, %c0_39] : memref<1x4x8x8xbf16, #tpu.memory_space<vmem>>, vector<1x1x8x8xbf16>
    %66 = vector.shape_cast %65 : vector<1x1x8x8xbf16> to vector<8x8xbf16>
    %67 = vector.shape_cast %64 : vector<8x8xbf16> to vector<1x1x8x8xbf16>
    tpu.vector_store %arg9[%c0_36, %c1_37, %c0_38, %c0_39], %67 {strides = array<i32>} : memref<1x4x8x8xbf16, #tpu.memory_space<vmem>>, vector<1x1x8x8xbf16>,
    %68 = vector.extract_strided_slice %31 {offsets = [0, 16], sizes = [8, 8], strides = [1, 1]} : vector<8x96xf32> to vector<8x8xf32>
    %cst_40 = arith.constant 0.353553385 : f32
    %69 = vector.broadcast %cst_40 : f32 to vector<8x8xf32>
    %70 = arith.mulf %68, %69 : vector<8x8xf32>
    %71 = arith.truncf %70 : vector<8x8xf32> to vector<8x8xbf16>
    %c0_41 = arith.constant 0 : index
    %c2 = arith.constant 2 : index
    %c0_42 = arith.constant 0 : index
    %c0_43 = arith.constant 0 : index
    %72 = vector.load %arg7[%c0_41, %c2, %c0_42, %c0_43] : memref<1x4x8x8xbf16, #tpu.memory_space<vmem>>, vector<1x1x8x8xbf16>
    %73 = vector.shape_cast %72 : vector<1x1x8x8xbf16> to vector<8x8xbf16>
    %74 = vector.shape_cast %71 : vector<8x8xbf16> to vector<1x1x8x8xbf16>
    tpu.vector_store %arg7[%c0_41, %c2, %c0_42, %c0_43], %74 {strides = array<i32>} : memref<1x4x8x8xbf16, #tpu.memory_space<vmem>>, vector<1x1x8x8xbf16>,
    %75 = vector.extract_strided_slice %33 {offsets = [16, 0], sizes = [8, 8], strides = [1, 1]} : vector<32x8xf32> to vector<8x8xf32>
    %76 = arith.truncf %75 : vector<8x8xf32> to vector<8x8xbf16>
    %c0_44 = arith.constant 0 : index
    %c2_45 = arith.constant 2 : index
    %c0_46 = arith.constant 0 : index
    %c0_47 = arith.constant 0 : index
    %77 = vector.load %arg8[%c0_44, %c2_45, %c0_46, %c0_47] : memref<1x4x8x8xbf16, #tpu.memory_space<vmem>>, vector<1x1x8x8xbf16>
    %78 = vector.shape_cast %77 : vector<1x1x8x8xbf16> to vector<8x8xbf16>
    %79 = vector.shape_cast %76 : vector<8x8xbf16> to vector<1x1x8x8xbf16>
    tpu.vector_store %arg8[%c0_44, %c2_45, %c0_46, %c0_47], %79 {strides = array<i32>} : memref<1x4x8x8xbf16, #tpu.memory_space<vmem>>, vector<1x1x8x8xbf16>,
    %80 = vector.extract_strided_slice %31 {offsets = [0, 80], sizes = [8, 8], strides = [1, 1]} : vector<8x96xf32> to vector<8x8xf32>
    %81 = arith.truncf %80 : vector<8x8xf32> to vector<8x8xbf16>
    %c0_48 = arith.constant 0 : index
    %c2_49 = arith.constant 2 : index
    %c0_50 = arith.constant 0 : index
    %c0_51 = arith.constant 0 : index
    %82 = vector.load %arg9[%c0_48, %c2_49, %c0_50, %c0_51] : memref<1x4x8x8xbf16, #tpu.memory_space<vmem>>, vector<1x1x8x8xbf16>
    %83 = vector.shape_cast %82 : vector<1x1x8x8xbf16> to vector<8x8xbf16>
    %84 = vector.shape_cast %81 : vector<8x8xbf16> to vector<1x1x8x8xbf16>
    tpu.vector_store %arg9[%c0_48, %c2_49, %c0_50, %c0_51], %84 {strides = array<i32>} : memref<1x4x8x8xbf16, #tpu.memory_space<vmem>>, vector<1x1x8x8xbf16>,
    %85 = vector.extract_strided_slice %31 {offsets = [0, 24], sizes = [8, 8], strides = [1, 1]} : vector<8x96xf32> to vector<8x8xf32>
    %cst_52 = arith.constant 0.353553385 : f32
    %86 = vector.broadcast %cst_52 : f32 to vector<8x8xf32>
    %87 = arith.mulf %85, %86 : vector<8x8xf32>
    %88 = arith.truncf %87 : vector<8x8xf32> to vector<8x8xbf16>
    %c0_53 = arith.constant 0 : index
    %c3 = arith.constant 3 : index
    %c0_54 = arith.constant 0 : index
    %c0_55 = arith.constant 0 : index
    %89 = vector.load %arg7[%c0_53, %c3, %c0_54, %c0_55] : memref<1x4x8x8xbf16, #tpu.memory_space<vmem>>, vector<1x1x8x8xbf16>
    %90 = vector.shape_cast %89 : vector<1x1x8x8xbf16> to vector<8x8xbf16>
    %91 = vector.shape_cast %88 : vector<8x8xbf16> to vector<1x1x8x8xbf16>
    tpu.vector_store %arg7[%c0_53, %c3, %c0_54, %c0_55], %91 {strides = array<i32>} : memref<1x4x8x8xbf16, #tpu.memory_space<vmem>>, vector<1x1x8x8xbf16>,
    %92 = vector.extract_strided_slice %33 {offsets = [24, 0], sizes = [8, 8], strides = [1, 1]} : vector<32x8xf32> to vector<8x8xf32>
    %93 = arith.truncf %92 : vector<8x8xf32> to vector<8x8xbf16>
    %c0_56 = arith.constant 0 : index
    %c3_57 = arith.constant 3 : index
    %c0_58 = arith.constant 0 : index
    %c0_59 = arith.constant 0 : index
    %94 = vector.load %arg8[%c0_56, %c3_57, %c0_58, %c0_59] : memref<1x4x8x8xbf16, #tpu.memory_space<vmem>>, vector<1x1x8x8xbf16>
    %95 = vector.shape_cast %94 : vector<1x1x8x8xbf16> to vector<8x8xbf16>
    %96 = vector.shape_cast %93 : vector<8x8xbf16> to vector<1x1x8x8xbf16>
    tpu.vector_store %arg8[%c0_56, %c3_57, %c0_58, %c0_59], %96 {strides = array<i32>} : memref<1x4x8x8xbf16, #tpu.memory_space<vmem>>, vector<1x1x8x8xbf16>,
    %97 = vector.extract_strided_slice %31 {offsets = [0, 88], sizes = [8, 8], strides = [1, 1]} : vector<8x96xf32> to vector<8x8xf32>
    %98 = arith.truncf %97 : vector<8x8xf32> to vector<8x8xbf16>
    %c0_60 = arith.constant 0 : index
    %c3_61 = arith.constant 3 : index
    %c0_62 = arith.constant 0 : index
    %c0_63 = arith.constant 0 : index
    %99 = vector.load %arg9[%c0_60, %c3_61, %c0_62, %c0_63] : memref<1x4x8x8xbf16, #tpu.memory_space<vmem>>, vector<1x1x8x8xbf16>
    %100 = vector.shape_cast %99 : vector<1x1x8x8xbf16> to vector<8x8xbf16>
    %101 = vector.shape_cast %98 : vector<8x8xbf16> to vector<1x1x8x8xbf16>
    tpu.vector_store %arg9[%c0_60, %c3_61, %c0_62, %c0_63], %101 {strides = array<i32>} : memref<1x4x8x8xbf16, #tpu.memory_space<vmem>>, vector<1x1x8x8xbf16>,
    return
  }
  func.func @transform_0(%arg0: i32, %arg1: i32) -> (i32, i32, i32) {
    %c0_i32 = arith.constant 0 : i32
    %c0_i32_0 = arith.constant 0 : i32
    return %arg0, %arg1, %c0_i32 : i32, i32, i32
  }
  func.func @transform_1(%arg0: i32, %arg1: i32) -> (i32, i32) {
    %c0_i32 = arith.constant 0 : i32
    %c0_i32_0 = arith.constant 0 : i32
    %c0_i32_1 = arith.constant 0 : i32
    return %c0_i32, %c0_i32_0 : i32, i32
  }
  func.func @transform_2(%arg0: i32, %arg1: i32) -> (i32, i32) {
    %c0_i32 = arith.constant 0 : i32
    %c0_i32_0 = arith.constant 0 : i32
    %c0_i32_1 = arith.constant 0 : i32
    return %c0_i32, %c0_i32_0 : i32, i32
  }
  func.func @transform_3(%arg0: i32, %arg1: i32) -> (i32, i32) {
    %c0_i32 = arith.constant 0 : i32
    %c0_i32_0 = arith.constant 0 : i32
    %c0_i32_1 = arith.constant 0 : i32
    return %c0_i32, %c0_i32_0 : i32, i32
  }
  func.func @transform_4(%arg0: i32, %arg1: i32) -> (i32, i32) {
    %c0_i32 = arith.constant 0 : i32
    %c0_i32_0 = arith.constant 0 : i32
    %c0_i32_1 = arith.constant 0 : i32
    return %c0_i32, %c0_i32_0 : i32, i32
  }
  func.func @transform_5(%arg0: i32, %arg1: i32) -> (i32, i32, i32, i32) {
    %c0_i32 = arith.constant 0 : i32
    %c0_i32_0 = arith.constant 0 : i32
    %c0_i32_1 = arith.constant 0 : i32
    return %arg0, %c0_i32, %arg1, %c0_i32_0 : i32, i32, i32, i32
  }
  func.func @transform_6(%arg0: i32, %arg1: i32) -> (i32, i32, i32, i32) {
    %c0_i32 = arith.constant 0 : i32
    %c0_i32_0 = arith.constant 0 : i32
    %c0_i32_1 = arith.constant 0 : i32
    return %arg0, %c0_i32, %c0_i32_0, %arg1 : i32, i32, i32, i32
  }
  func.func @transform_7(%arg0: i32, %arg1: i32) -> (i32, i32, i32, i32) {
    %c0_i32 = arith.constant 0 : i32
    %c0_i32_0 = arith.constant 0 : i32
    %c0_i32_1 = arith.constant 0 : i32
    return %arg0, %c0_i32, %arg1, %c0_i32_0 : i32, i32, i32, i32
  }
}

</mosaic_0001>

<llo_original>
// kernel: tpu_custom_call.1
$region0: #{tpu_custom_call.1}
  #allocation0 [shape = 'u32[]', space=smem, size = 0x4, offset = 0x4, fixed_abs, tag = 'smem constant byte address 0x4 - core index']
  #allocation1 [shape = 'u32[144,128]{1,0:T(1,128)}', space=vmem, size = 0x12000, scoped, tag = 'internal scratch']
  %s0 = inlined_call_operand.hbm [shape: f32[2,8,32], index: 0, kind: input, shape index: {}]
  %s1 = inlined_call_operand.vmem [shape: f32[1,32], index: 1, kind: input, shape index: {}]
  %s2 = inlined_call_operand.vmem [shape: f32[1,32], index: 2, kind: input, shape index: {}]
  %s3 = inlined_call_operand.hbm [shape: bf16[32,96], index: 3, kind: input, shape index: {}]
  %s4 = inlined_call_operand.vmem [shape: f32[1,96], index: 4, kind: input, shape index: {}]
  %s5 = inlined_call_operand.hbm [shape: bf16[2,4,8,8], index: 5, kind: output, shape index: {0}]
  %s6 = inlined_call_operand.hbm [shape: bf16[2,4,8,8], index: 6, kind: output, shape index: {1}]
  %s7 = inlined_call_operand.hbm [shape: bf16[2,4,8,8], index: 7, kind: output, shape index: {2}]
  %8 = xla_tuple %s5, %s6, %s7
  %s9 = sld [smem:[#allocation0]]
  $region77: #{tpu_custom_call.1} parent=0
    _
  %s11 = ssub.s32 1, %s9
  %s12 = scalar_select 0, %s11, %s9
  $region1: #{tpu_custom_call.1} parent=0
    #allocation2 [shape = 'u8[8192]{0}', space=vmem, size = 0x2000, scoped, tag = 'input window, operand 0']
    #allocation3 [shape = 's32[2]{0}', space=sflag, size = 0x8, scoped, tag = 'scoped memory for tpu_custom_call.1']
    #allocation4 [shape = 's32[2]{0}', space=sflag, size = 0x8, scoped, tag = 'scoped memory for tpu_custom_call.1']
    #allocation5 [shape = 'u8[8192]{0}', space=vmem, size = 0x2000, scoped, tag = 'input window, operand 3, single buffered']
    #allocation6 [shape = 's32[1]{0}', space=sflag, size = 0x4, scoped, tag = 'scoped memory for tpu_custom_call.1']
    #allocation7 [shape = 'u8[16384]{0}', space=vmem, size = 0x4000, scoped, tag = 'output window, operand 0']
    #allocation8 [shape = 'u8[16384]{0}', space=vmem, size = 0x4000, scoped, tag = 'output window, operand 1']
    #allocation9 [shape = 's32[2]{0}', space=sflag, size = 0x8, scoped, tag = 'scoped memory for tpu_custom_call.1']
    #allocation10 [shape = 'u8[16384]{0}', space=vmem, size = 0x4000, scoped, tag = 'output window, operand 2']
    %13 = vsyncpa [#allocation3], 0
    %s14 = scalar_lea.sflag [#allocation3], 1
    %15 = vsyncpa %s14, 0
    %16 = vsyncpa [#allocation6], 0
    %17 = vsyncpa [#allocation4], 0
    %s18 = scalar_lea.sflag [#allocation4], 1
    %19 = vsyncpa %s18, 0
    %20 = vsyncpa [#allocation9], 0
    %s21 = scalar_lea.sflag [#allocation9], 1
    %22 = vsyncpa %s21, 0
    loop: start=0, step=1, limit=4
    $region2: #{tpu_custom_call.1} parent=1 // loop_pre_header
      _
    $region3: #{tpu_custom_call.1} parent=1 // loop_header
      %s24 = sphi 0, %s28
      %p25 = scmp.ge.s32.totalorder %s24, 4
      %s31 = sphi 0, %s43
      %s32 = sphi 0, %s39
      %s33 = sphi 0, %s31
      %s34 = sphi 0, %s32
      %s35 = sphi 0, %s33
      %s36 = sphi 0, %s34
      %s48 = sphi 0, %s50
      %s51 = sphi 0, %s48
      %s52 = sphi 0, %s51
      %s68 = sphi 0, %s52
      %s72 = sphi 0, %s72
      %s74 = sphi 0, %s72
      %s75 = sphi 0, %s74
      %s89 = sphi 0, %s75
      %s93 = sphi 0, %s93
      %s95 = sphi 0, %s93
      %s96 = sphi 0, %s95
      %s110 = sphi 0, %s96
      %s114 = sphi 0, %s114
      %s116 = sphi 0, %s114
      %s117 = sphi 0, %s116
      %s131 = sphi 0, %s117
      %s135 = sphi 0, %s135
      %s137 = sphi 0, %s135
      %s138 = sphi 0, %s137
      %s152 = sphi 0, %s138
      %s160 = sphi 0, %s162
      %s163 = sphi 0, %s160
      %s164 = sphi 0, %s163
      %s180 = sphi 0, %s164
      %s188 = sphi 0, %s190
      %s191 = sphi 0, %s188
      %s192 = sphi 0, %s191
      %s208 = sphi 0, %s192
      %s216 = sphi 0, %s218
      %s219 = sphi 0, %s216
      %s220 = sphi 0, %s219
      %s236 = sphi 0, %s220
    $region4: #{tpu_custom_call.1} parent=1 // loop_header_branch
      %27 = sbr.rel (%p25) target = $region8
    $region5: #{tpu_custom_call.1} parent=1 // loop_body
      %s29 = ssub.s32 %s24, 1
      %s30 = ssub.s32 %s24, 2
      %s37 = sadd.s32 1, %s32
      %p38 = scmp.ge.s32.totalorder %s37, 1
      %s39 = scalar_select %p38, 0, %s37
      %s40 = sadd.s32 1, %s31
      %s41 = scalar_select %p38, %s40, %s31
      %p42 = scmp.ge.s32.totalorder %s41, 2
      %s43 = scalar_select %p42, 0, %s41
      %s44 = ssub.s32 %s31, %s43
      %s45 = ssub.s32 %s32, %s39
      %s46 = sor.u32 %s44, %s45
      %p47 = scmp.eq.s32.totalorder %s46, 0
      %s49 = sadd.s32 %s48, 1
      %s50 = scalar_select %p47, %s48, %s49
      %p53 = pneg %p47
      %p54 = scmp.eq.s32.totalorder %s24, 1
      %p55 = por %p53, %p54
      %p56 = scmp.ne.s32.totalorder %s48, %s51
      %p57 = scmp.eq.s32.totalorder %s24, 0
      %p58 = por %p56, %p57
      %p59 = scmp.ne.s32.totalorder %s48, %s51
      %p60 = scmp.eq.s32.totalorder %s29, 1
      %p61 = por %p59, %p60
      %p62 = scmp.ne.s32.totalorder %s51, %s52
      %p63 = scmp.eq.s32.totalorder %s29, 0
      %p64 = por %p62, %p63
      %p65 = scmp.ne.s32.totalorder %s51, %s52
      %p66 = scmp.eq.s32.totalorder %s30, 1
      %p67 = por %p65, %p66
      %p69 = scmp.ne.s32.totalorder %s52, %s68
      %p70 = scmp.eq.s32.totalorder %s30, 0
      %p71 = por %p69, %p70
      %s73 = sadd.s32 %s72, 1
      %p76 = scmp.eq.s32.totalorder %s24, 1
      %p77 = scmp.ne.s32.totalorder %s72, %s74
      %p78 = scmp.eq.s32.totalorder %s24, 0
      %p79 = por %p77, %p78
      %p80 = scmp.ne.s32.totalorder %s72, %s74
      %p81 = scmp.eq.s32.totalorder %s29, 1
      %p82 = por %p80, %p81
      %p83 = scmp.ne.s32.totalorder %s74, %s75
      %p84 = scmp.eq.s32.totalorder %s29, 0
      %p85 = por %p83, %p84
      %p86 = scmp.ne.s32.totalorder %s74, %s75
      %p87 = scmp.eq.s32.totalorder %s30, 1
      %p88 = por %p86, %p87
      %p90 = scmp.ne.s32.totalorder %s75, %s89
      %p91 = scmp.eq.s32.totalorder %s30, 0
      %p92 = por %p90, %p91
      %s94 = sadd.s32 %s93, 1
      %p97 = scmp.eq.s32.totalorder %s24, 1
      %p98 = scmp.ne.s32.totalorder %s93, %s95
      %p99 = scmp.eq.s32.totalorder %s24, 0
      %p100 = por %p98, %p99
      %p101 = scmp.ne.s32.totalorder %s93, %s95
      %p102 = scmp.eq.s32.totalorder %s29, 1
      %p103 = por %p101, %p102
      %p104 = scmp.ne.s32.totalorder %s95, %s96
      %p105 = scmp.eq.s32.totalorder %s29, 0
      %p106 = por %p104, %p105
      %p107 = scmp.ne.s32.totalorder %s95, %s96
      %p108 = scmp.eq.s32.totalorder %s30, 1
      %p109 = por %p107, %p108
      %p111 = scmp.ne.s32.totalorder %s96, %s110
      %p112 = scmp.eq.s32.totalorder %s30, 0
      %p113 = por %p111, %p112
      %s115 = sadd.s32 %s114, 1
      %p118 = scmp.eq.s32.totalorder %s24, 1
      %p119 = scmp.ne.s32.totalorder %s114, %s116
      %p120 = scmp.eq.s32.totalorder %s24, 0
      %p121 = por %p119, %p120
      %p122 = scmp.ne.s32.totalorder %s114, %s116
      %p123 = scmp.eq.s32.totalorder %s29, 1
      %p124 = por %p122, %p123
      %p125 = scmp.ne.s32.totalorder %s116, %s117
      %p126 = scmp.eq.s32.totalorder %s29, 0
      %p127 = por %p125, %p126
      %p128 = scmp.ne.s32.totalorder %s116, %s117
      %p129 = scmp.eq.s32.totalorder %s30, 1
      %p130 = por %p128, %p129
      %p132 = scmp.ne.s32.totalorder %s117, %s131
      %p133 = scmp.eq.s32.totalorder %s30, 0
      %p134 = por %p132, %p133
      %s136 = sadd.s32 %s135, 1
      %p139 = scmp.eq.s32.totalorder %s24, 1
      %p140 = scmp.ne.s32.totalorder %s135, %s137
      %p141 = scmp.eq.s32.totalorder %s24, 0
      %p142 = por %p140, %p141
      %p143 = scmp.ne.s32.totalorder %s135, %s137
      %p144 = scmp.eq.s32.totalorder %s29, 1
      %p145 = por %p143, %p144
      %p146 = scmp.ne.s32.totalorder %s137, %s138
      %p147 = scmp.eq.s32.totalorder %s29, 0
      %p148 = por %p146, %p147
      %p149 = scmp.ne.s32.totalorder %s137, %s138
      %p150 = scmp.eq.s32.totalorder %s30, 1
      %p151 = por %p149, %p150
      %p153 = scmp.ne.s32.totalorder %s138, %s152
      %p154 = scmp.eq.s32.totalorder %s30, 0
      %p155 = por %p153, %p154
      %s156 = ssub.s32 %s31, %s43
      %s157 = ssub.s32 %s32, %s39
      %s158 = sor.u32 %s156, %s157
      %p159 = scmp.eq.s32.totalorder %s158, 0
      %s161 = sadd.s32 %s160, 1
      %s162 = scalar_select %p159, %s160, %s161
      %p165 = pneg %p159
      %p166 = scmp.eq.s32.totalorder %s24, 1
      %p167 = por %p165, %p166
      %p168 = scmp.ne.s32.totalorder %s160, %s163
      %p169 = scmp.eq.s32.totalorder %s24, 0
      %p170 = por %p168, %p169
      %p171 = scmp.ne.s32.totalorder %s160, %s163
      %p172 = scmp.eq.s32.totalorder %s29, 1
      %p173 = por %p171, %p172
      %p174 = scmp.ne.s32.totalorder %s163, %s164
      %p175 = scmp.eq.s32.totalorder %s29, 0
      %p176 = por %p174, %p175
      %p177 = scmp.ne.s32.totalorder %s163, %s164
      %p178 = scmp.eq.s32.totalorder %s30, 1
      %p179 = por %p177, %p178
      %p181 = scmp.ne.s32.totalorder %s164, %s180
      %p182 = scmp.eq.s32.totalorder %s30, 0
      %p183 = por %p181, %p182
      %s184 = ssub.s32 %s31, %s43
      %s185 = ssub.s32 %s32, %s39
      %s186 = sor.u32 %s184, %s185
      %p187 = scmp.eq.s32.totalorder %s186, 0
      %s189 = sadd.s32 %s188, 1
      %s190 = scalar_select %p187, %s188, %s189
      %p193 = pneg %p187
      %p194 = scmp.eq.s32.totalorder %s24, 1
      %p195 = por %p193, %p194
      %p196 = scmp.ne.s32.totalorder %s188, %s191
      %p197 = scmp.eq.s32.totalorder %s24, 0
      %p198 = por %p196, %p197
      %p199 = scmp.ne.s32.totalorder %s188, %s191
      %p200 = scmp.eq.s32.totalorder %s29, 1
      %p201 = por %p199, %p200
      %p202 = scmp.ne.s32.totalorder %s191, %s192
      %p203 = scmp.eq.s32.totalorder %s29, 0
      %p204 = por %p202, %p203
      %p205 = scmp.ne.s32.totalorder %s191, %s192
      %p206 = scmp.eq.s32.totalorder %s30, 1
      %p207 = por %p205, %p206
      %p209 = scmp.ne.s32.totalorder %s192, %s208
      %p210 = scmp.eq.s32.totalorder %s30, 0
      %p211 = por %p209, %p210
      %s212 = ssub.s32 %s31, %s43
      %s213 = ssub.s32 %s32, %s39
      %s214 = sor.u32 %s212, %s213
      %p215 = scmp.eq.s32.totalorder %s214, 0
      %s217 = sadd.s32 %s216, 1
      %s218 = scalar_select %p215, %s216, %s217
      %p221 = pneg %p215
      %p222 = scmp.eq.s32.totalorder %s24, 1
      %p223 = por %p221, %p222
      %p224 = scmp.ne.s32.totalorder %s216, %s219
      %p225 = scmp.eq.s32.totalorder %s24, 0
      %p226 = por %p224, %p225
      %p227 = scmp.ne.s32.totalorder %s216, %s219
      %p228 = scmp.eq.s32.totalorder %s29, 1
      %p229 = por %p227, %p228
      %p230 = scmp.ne.s32.totalorder %s219, %s220
      %p231 = scmp.eq.s32.totalorder %s29, 0
      %p232 = por %p230, %p231
      %p233 = scmp.ne.s32.totalorder %s219, %s220
      %p234 = scmp.eq.s32.totalorder %s30, 1
      %p235 = por %p233, %p234
      %p237 = scmp.ne.s32.totalorder %s220, %s236
      %p238 = scmp.eq.s32.totalorder %s30, 0
      %p239 = por %p237, %p238
      %p240 = scmp.le.s32.totalorder 1, %s24
      %p241 = scmp.lt.s32.totalorder %s24, 3
      %p242 = pnand %p240, %p241
      %p243 = pneg %p242
      // Predicated region
      $region9: #{tpu_custom_call.1} parent=5 // pred_check
        _
      $region10: #{tpu_custom_call.1} parent=5 // pred_check_branch
        %245 = sbr.rel (%p242) target = $region12
      $region11: #{tpu_custom_call.1} parent=5 // pred_region
        %s246 = ssub.s32 %s24, 1
        // Predicated region
        $region13: #{tpu_custom_call.1} parent=11 // pred_check
          %p247 = pneg %p85
        $region14: #{tpu_custom_call.1} parent=11 // pred_check_branch
          %249 = sbr.rel (%p247) target = $region16
        $region15: #{tpu_custom_call.1} parent=11 // pred_region
          _
        $region16: #{tpu_custom_call.1} parent=11 // pred_fallthru
          _
        // Predicated region
        $region17: #{tpu_custom_call.1} parent=11 // pred_check
          %p250 = pneg %p106
        $region18: #{tpu_custom_call.1} parent=11 // pred_check_branch
          %252 = sbr.rel (%p250) target = $region20
        $region19: #{tpu_custom_call.1} parent=11 // pred_region
          _
        $region20: #{tpu_custom_call.1} parent=11 // pred_fallthru
          _
        // Predicated region
        $region21: #{tpu_custom_call.1} parent=11 // pred_check
          %p253 = pneg %p127
        $region22: #{tpu_custom_call.1} parent=11 // pred_check_branch
          %255 = sbr.rel (%p253) target = $region24
        $region23: #{tpu_custom_call.1} parent=11 // pred_region
          %s257 = ssub.s32 256, 256
          %258 = vsyncadd [#allocation6], %s257
          %s259 = sshll.u32 [#allocation5], 4
          %s260 = int_to_ptr.vmem [resolvable:$true] %s259
          %265 = dma.hbm_to_vmem [thread:$0]  %s3, 256, %s260, [#allocation6], 64, 64, 4
        $region24: #{tpu_custom_call.1} parent=11 // pred_fallthru
          _
        // Predicated region
        $region25: #{tpu_custom_call.1} parent=11 // pred_check
          %p266 = pneg %p148
        $region26: #{tpu_custom_call.1} parent=11 // pred_check_branch
          %268 = sbr.rel (%p266) target = $region28
        $region27: #{tpu_custom_call.1} parent=11 // pred_region
          _
        $region28: #{tpu_custom_call.1} parent=11 // pred_fallthru
          _
      $region12: #{tpu_custom_call.1} parent=5 // pred_fallthru
        _
      %p269 = scmp.lt.s32.totalorder %s24, 2
      // Predicated region
      $region29: #{tpu_custom_call.1} parent=5 // pred_check
        %p270 = pneg %p269
      $region30: #{tpu_custom_call.1} parent=5 // pred_check_branch
        %272 = sbr.rel (%p270) target = $region32
      $region31: #{tpu_custom_call.1} parent=5 // pred_region
        // Predicated region
        $region33: #{tpu_custom_call.1} parent=31 // pred_check
          %p273 = pneg %p58
        $region34: #{tpu_custom_call.1} parent=31 // pred_check_branch
          %275 = sbr.rel (%p273) target = $region36
        $region35: #{tpu_custom_call.1} parent=31 // pred_region
          %s276 = sand.u32 %s48, 1
          %s277 = scalar_lea.sflag [#allocation3], %s276
          %s278 = sand.u32 %s48, 1
          %s279 = smul.addr %s278, 8
          %s280 = scalar_lea.vmem [#allocation2], %s279
          %s282 = ssub.s32 128, 128
          %283 = vsyncadd %s277, %s282
          %s284 = sadd.s32 %s32, %s31
          %s285 = smul.addr %s284, 128
          %s286 = scalar_lea.hbm %s0, %s285
          %s288 = sshll.u32 %s280, 4
          %s289 = int_to_ptr.vmem [resolvable:$true] %s288
          %291 = dma.hbm_to_vmem [thread:$0]  %s286, 128, %s289, %s277
        $region36: #{tpu_custom_call.1} parent=31 // pred_fallthru
          _
      $region32: #{tpu_custom_call.1} parent=5 // pred_fallthru
        _
      %p292 = scmp.le.s32.totalorder 1, %s24
      %p293 = scmp.lt.s32.totalorder %s24, 3
      %p294 = pnand %p292, %p293
      %p295 = pneg %p294
      // Predicated region
      $region37: #{tpu_custom_call.1} parent=5 // pred_check
        _
      $region38: #{tpu_custom_call.1} parent=5 // pred_check_branch
        %297 = sbr.rel (%p294) target = $region40
      $region39: #{tpu_custom_call.1} parent=5 // pred_region
        %s298 = ssub.s32 %s24, 1
        %s299 = sand.u32 %s51, 1
        %s300 = scalar_lea.sflag [#allocation3], %s299
        %s301 = sand.u32 %s51, 1
        %s302 = smul.addr %s301, 8
        %s303 = scalar_lea.vmem [#allocation2], %s302
        // Predicated region
        $region41: #{tpu_custom_call.1} parent=39 // pred_check
          %p304 = pneg %p64
        $region42: #{tpu_custom_call.1} parent=39 // pred_check_branch
          %306 = sbr.rel (%p304) target = $region44
        $region43: #{tpu_custom_call.1} parent=39 // pred_region
          %307 = dma.done %s300, 128
        $region44: #{tpu_custom_call.1} parent=39 // pred_fallthru
          _
        // Predicated region
        $region45: #{tpu_custom_call.1} parent=39 // pred_check
          %p308 = pneg %p127
        $region46: #{tpu_custom_call.1} parent=39 // pred_check_branch
          %310 = sbr.rel (%p308) target = $region48
        $region47: #{tpu_custom_call.1} parent=39 // pred_region
          %311 = dma.done [#allocation6], 256
        $region48: #{tpu_custom_call.1} parent=39 // pred_fallthru
          _
        %s312 = sand.u32 %s51, 1
        %s313 = scalar_lea.sflag [#allocation3], %s312
        %s314 = sand.u32 %s51, 1
        %s315 = smul.addr %s314, 8
        %s316 = scalar_lea.vmem [#allocation2], %s315
        %p317 = pneg %p64
        %p318 = pneg %p61
        %p319 = pneg %p85
        %p320 = pneg %p82
        %p321 = pneg %p106
        %p322 = pneg %p103
        %p323 = pneg %p127
        %p324 = pneg %p124
        %p325 = pneg %p148
        %p326 = pneg %p145
        %p327 = pneg %p176
        %p328 = pneg %p173
        %s329 = sand.u32 %s163, 1
        %s330 = scalar_lea.sflag [#allocation4], %s329
        %s331 = sand.u32 %s163, 1
        %s332 = smul.addr %s331, 16
        %s333 = scalar_lea.vmem [#allocation7], %s332
        %p334 = pneg %p204
        %p335 = pneg %p201
        %s336 = sand.u32 %s29, 1
        %s337 = scalar_lea.sflag [#allocation9], %s336
        %s338 = sand.u32 %s191, 1
        %s339 = smul.addr %s338, 16
        %s340 = scalar_lea.vmem [#allocation8], %s339
        %p341 = pneg %p232
        %p342 = pneg %p229
        %s343 = sand.u32 %s29, 1
        %s344 = scalar_lea.sflag [#allocation9], %s343
        %s345 = sand.u32 %s219, 1
        %s346 = smul.addr %s345, 16
        %s347 = scalar_lea.vmem [#allocation10], %s346
        %v349 = vld [vmem:[%s303] sm:$0xff]
        %v350 = vld [vmem:[%s1] sm:$0x1]
        %v351 = vld [vmem:[%s2] sm:$0x1]
        %vm352 = vcmask 261120
        %v353 = vsel %vm352, %v349, 0.0
        %354 = vadd.xlane.f32.xlu0 %v353
        %v355 = vpop.xlane.xlu0 %354
        %v356 = vrcp.pop 32.0
        %v357 = vmul.f32 %v355, %v356
        %v358 = vsub.f32 %v349, %v357
        %v359 = vmul.f32 %v358, %v358
        %v360 = vsel %vm352, %v359, 0.0
        %361 = vadd.xlane.f32.xlu0 %v360
        %v362 = vpop.xlane.xlu0 %361
        %v363 = vmul.f32 %v362, %v356
        %v364 = vadd.f32 %v363, 1e-06
        %v365 = vrsqrt.pop %v364
        %v366 = vmul.f32 %v358, %v365
        %v368 = vlaneseq
        %v369 = vshrl.u32 %v368, 7
        %v370 = vsub.s32 0, %v369
        %v371 = vrot.slane %v350, %v370
        %v373 = vmul.f32 %v366, %v371
        %v375 = vlaneseq
        %v376 = vshrl.u32 %v375, 7
        %v377 = vsub.s32 0, %v376
        %v378 = vrot.slane %v351, %v377
        %v380 = vadd.f32 %v373, %v378
        %v381 = vpack.c.bf16 %v380, %v380
        %v382 = vld [vmem:[#allocation5] sm:$0xf]
        %v383 = vld [vmem:[#allocation5 + $0x4] sm:$0xf]
        %v384 = vld [vmem:[#allocation5 + $0x8] sm:$0xf]
        %v385 = vld [vmem:[#allocation5 + $0xc] sm:$0xf]
        %v386 = vld [vmem:[%s4] sm:$0x1]
        %v388 = vlaneseq
        %v389 = vshrl.u32 %v388, 7
        %v390 = vsub.s32 0, %v389
        %v391 = vrot.slane %v386, %v390
        %v397 = vunpack.c.l.b16 %v382
        %v398 = vunpack.c.l.b16 %v383
        %v399 = vunpack.c.l.b16 %v384
        %v400 = vunpack.c.l.b16 %v385
        %v401 = vpack.c.b16 %v398, %v397
        %v402 = vpack.c.b16 %v400, %v399
        %v406 = vsel %vm352, %v381, 0
        %408 = vmatprep.subr.bf16.mxu0 0
        %409 = vmatpush1.bf16.msra.mxu0 %v401
        %410 = vmatprep.subr.bf16.mxu0 0
        %411 = vmatpush1.bf16.msra.mxu0 %v402
        %412 = vmatprep.subr.bf16.mxu0 0
        %413 = vmatpush1.bf16.msra.mxu0 0
        %414 = vmatprep.subr.bf16.mxu0 0
        %415 = vmatpush1.bf16.msra.mxu0 0
        %416 = vmatprep.subr.bf16.mxu0 0
        %417 = vmatpush1.bf16.msra.mxu0 0
        %418 = vmatprep.subr.bf16.mxu0 0
        %419 = vmatpush1.bf16.msra.mxu0 0
        %420 = vmatprep.subr.bf16.mxu0 0
        %421 = vmatpush1.bf16.msra.mxu0 0
        %422 = vmatprep.subr.bf16.mxu0 0
        %423 = vmatpush1.bf16.msra.mxu0 0
        %424 = vmatprep.subr.bf16.mxu0 0
        %425 = vmatpush1.bf16.msra.mxu0 0
        %426 = vmatprep.subr.bf16.mxu0 0
        %427 = vmatpush1.bf16.msra.mxu0 0
        %428 = vmatprep.subr.bf16.mxu0 0
        %429 = vmatpush1.bf16.msra.mxu0 0
        %430 = vmatprep.subr.bf16.mxu0 0
        %431 = vmatpush1.bf16.msra.mxu0 0
        %432 = vmatprep.subr.bf16.mxu0 0
        %433 = vmatpush1.bf16.msra.mxu0 0
        %434 = vmatprep.subr.bf16.mxu0 0
        %435 = vmatpush1.bf16.msra.mxu0 0
        %436 = vmatprep.subr.bf16.mxu0 0
        %437 = vmatpush1.bf16.msra.mxu0 0
        %438 = vmatprep.subr.bf16.mxu0 0
        %439 = vmatpush1.bf16.msra.mxu0 0
        %440 = vmatprep.mubr.bf16.mxu0 0
        %441 = vmatmul.mubr.bf16.gmra.mrb[0].mxu0 %v406
        %v442 = vpop.f32.mrb[0].mxu0
        %v443 = vadd.f32 %v391, %v442
        %v444 = vpop.f32.mrb[0].mxu0
        %v445 = vpop.f32.mrb[0].mxu0
        %v446 = vpop.f32.mrb[0].mxu0
        %447 = vdwg.mxu0
        %449 = vrot.lane.b32.xlu0 %v443, 96
        %v450 = vpop.permute.xlu0 %449
        %452 = vxpose.xlu0.b32.start [1/16] %v450, 128
        %453 = vxpose.xlu0.b32.cont [2/16] 0.0, 128
        %454 = vxpose.xlu0.b32.cont [3/16] 0.0, 128
        %455 = vxpose.xlu0.b32.cont [4/16] 0.0, 128
        %456 = vxpose.xlu0.b32.cont [5/16] 0.0, 128
        %457 = vxpose.xlu0.b32.cont [6/16] 0.0, 128
        %458 = vxpose.xlu0.b32.cont [7/16] 0.0, 128
        %459 = vxpose.xlu0.b32.cont [8/16] 0.0, 128
        %460 = vxpose.xlu0.b32.cont [9/16] 0.0, 128
        %461 = vxpose.xlu0.b32.cont [10/16] 0.0, 128
        %462 = vxpose.xlu0.b32.cont [11/16] 0.0, 128
        %463 = vxpose.xlu0.b32.cont [12/16] 0.0, 128
        %464 = vxpose.xlu0.b32.cont [13/16] 0.0, 128
        %465 = vxpose.xlu0.b32.cont [14/16] 0.0, 128
        %466 = vxpose.xlu0.b32.cont [15/16] 0.0, 128
        %467 = vxpose.xlu0.b32.end [16/16] 0.0, 128
        %v468 = vpop.trf.xlu0
        %v469 = vpop.trf.xlu0
        %v470 = vpop.trf.xlu0
        %v471 = vpop.trf.xlu0
        %v472 = vpop.trf.xlu0
        %v473 = vpop.trf.xlu0
        %v474 = vpop.trf.xlu0
        %v475 = vpop.trf.xlu0
        %v476 = vpop.trf.xlu0
        %v477 = vpop.trf.xlu0
        %v478 = vpop.trf.xlu0
        %v479 = vpop.trf.xlu0
        %v480 = vpop.trf.xlu0
        %v481 = vpop.trf.xlu0
        %v482 = vpop.trf.xlu0
        %v483 = vpop.trf.xlu0
        %v484 = vmul.f32 %v443, 0.35355338
        %v485 = vpack.c.bf16 %v484, %v484
        %vm486 = vcmask 60416
        %487 = vst.msk [vmem:[%s333] sm:$0xf] %vm486, %v485
        %v488 = vpack.c.bf16 %v468, %v468
        %489 = vst.msk [vmem:[%s340] sm:$0xf] %vm486, %v488
        %v490 = vpack.c.bf16 %v443, %v443
        %v492 = vunpack.c.l.b16 %v490
        %v493 = vpack.c.b16 %v492, %v492
        %494 = vrot.lane.b32.xlu0 %v493, 64
        %v495 = vpop.permute.xlu0 %494
        %497 = vst.msk [vmem:[%s347] sm:$0xf] %vm486, %v495
        %v499 = vunpack.c.l.b16 %v485
        %v500 = vpack.c.b16 %v499, %v499
        %501 = vrot.lane.b32.xlu0 %v500, 120
        %v502 = vpop.permute.xlu0 %501
        %s504 = scalar_lea.vmem %s333, 4 [#allocation7]
        %505 = vst.msk [vmem:[%s504] sm:$0xf] %vm486, %v502
        %v506 = vpack.c.bf16 %v469, %v469
        %s507 = scalar_lea.vmem %s340, 4 [#allocation8]
        %508 = vst.msk [vmem:[%s507] sm:$0xf] %vm486, %v506
        %509 = vrot.lane.b32.xlu0 %v493, 56
        %v510 = vpop.permute.xlu0 %509
        %s512 = scalar_lea.vmem %s347, 4 [#allocation10]
        %513 = vst.msk [vmem:[%s512] sm:$0xf] %vm486, %v510
        %514 = vrot.lane.b32.xlu0 %v500, 112
        %v515 = vpop.permute.xlu0 %514
        %s517 = scalar_lea.vmem %s333, 8 [#allocation7]
        %518 = vst.msk [vmem:[%s517] sm:$0xf] %vm486, %v515
        %v519 = vpack.c.bf16 %v470, %v470
        %s520 = scalar_lea.vmem %s340, 8 [#allocation8]
        %521 = vst.msk [vmem:[%s520] sm:$0xf] %vm486, %v519
        %522 = vrot.lane.b32.xlu0 %v493, 48
        %v523 = vpop.permute.xlu0 %522
        %s525 = scalar_lea.vmem %s347, 8 [#allocation10]
        %526 = vst.msk [vmem:[%s525] sm:$0xf] %vm486, %v523
        %527 = vrot.lane.b32.xlu0 %v500, 104
        %v528 = vpop.permute.xlu0 %527
        %s530 = scalar_lea.vmem %s333, 12 [#allocation7]
        %531 = vst.msk [vmem:[%s530] sm:$0xf] %vm486, %v528
        %v532 = vpack.c.bf16 %v471, %v471
        %s533 = scalar_lea.vmem %s340, 12 [#allocation8]
        %534 = vst.msk [vmem:[%s533] sm:$0xf] %vm486, %v532
        %535 = vrot.lane.b32.xlu0 %v493, 40
        %v536 = vpop.permute.xlu0 %535
        %s538 = scalar_lea.vmem %s347, 12 [#allocation10]
        %539 = vst.msk [vmem:[%s538] sm:$0xf] %vm486, %v536
        %s540 = sand.u32 %s163, 1
        %s541 = scalar_lea.sflag [#allocation4], %s540
        %s542 = sand.u32 %s163, 1
        %s543 = smul.addr %s542, 16
        %s544 = scalar_lea.vmem [#allocation7], %s543
        %s545 = sand.u32 %s29, 1
        %s546 = scalar_lea.sflag [#allocation9], %s545
        %s547 = sand.u32 %s191, 1
        %s548 = smul.addr %s547, 16
        %s549 = scalar_lea.vmem [#allocation8], %s548
        %s550 = sand.u32 %s29, 1
        %s551 = scalar_lea.sflag [#allocation9], %s550
        %s552 = sand.u32 %s219, 1
        %s553 = smul.addr %s552, 16
        %s554 = scalar_lea.vmem [#allocation10], %s553
        // Predicated region
        $region49: #{tpu_custom_call.1} parent=39 // pred_check
          %p555 = pneg %p173
        $region50: #{tpu_custom_call.1} parent=39 // pred_check_branch
          %557 = sbr.rel (%p555) target = $region52
        $region51: #{tpu_custom_call.1} parent=39 // pred_region
          %s559 = ssub.s32 256, 256
          %560 = vsyncadd %s541, %s559
          %s561 = smul.addr %s33, 4
          %s562 = sadd.s32 %s34, %s561
          %s563 = smul.addr %s562, 64
          %s564 = scalar_lea.hbm %s5, %s563
          %s565 = sshll.u32 %s544, 4
          %s566 = int_to_ptr.vmem [resolvable:$true] %s565
          %571 = dma.vmem_to_hbm [thread:$0]  %s566, 256, %s564, %s541, 64, 64, 4
        $region52: #{tpu_custom_call.1} parent=39 // pred_fallthru
          _
        // Predicated region
        $region53: #{tpu_custom_call.1} parent=39 // pred_check
          %p572 = pneg %p201
        $region54: #{tpu_custom_call.1} parent=39 // pred_check_branch
          %574 = sbr.rel (%p572) target = $region56
        $region55: #{tpu_custom_call.1} parent=39 // pred_region
          %s576 = ssub.s32 256, 256
          %577 = vsyncadd %s546, %s576
          %s578 = smul.addr %s33, 4
          %s579 = sadd.s32 %s34, %s578
          %s580 = smul.addr %s579, 64
          %s581 = scalar_lea.hbm %s6, %s580
          %s582 = sshll.u32 %s549, 4
          %s583 = int_to_ptr.vmem [resolvable:$true] %s582
          %588 = dma.vmem_to_hbm [thread:$0]  %s583, 256, %s581, %s546, 64, 64, 4
        $region56: #{tpu_custom_call.1} parent=39 // pred_fallthru
          _
        // Predicated region
        $region57: #{tpu_custom_call.1} parent=39 // pred_check
          %p589 = pneg %p229
        $region58: #{tpu_custom_call.1} parent=39 // pred_check_branch
          %591 = sbr.rel (%p589) target = $region60
        $region59: #{tpu_custom_call.1} parent=39 // pred_region
          %s593 = ssub.s32 256, 256
          %594 = vsyncadd %s551, %s593
          %s595 = smul.addr %s33, 4
          %s596 = sadd.s32 %s34, %s595
          %s597 = smul.addr %s596, 64
          %s598 = scalar_lea.hbm %s7, %s597
          %s599 = sshll.u32 %s554, 4
          %s600 = int_to_ptr.vmem [resolvable:$true] %s599
          %605 = dma.vmem_to_hbm [thread:$0]  %s600, 256, %s598, %s551, 64, 64, 4
        $region60: #{tpu_custom_call.1} parent=39 // pred_fallthru
          _
      $region40: #{tpu_custom_call.1} parent=5 // pred_fallthru
        _
      %p606 = scmp.le.s32.totalorder 2, %s24
      // Predicated region
      $region61: #{tpu_custom_call.1} parent=5 // pred_check
        %p607 = pneg %p606
      $region62: #{tpu_custom_call.1} parent=5 // pred_check_branch
        %609 = sbr.rel (%p607) target = $region64
      $region63: #{tpu_custom_call.1} parent=5 // pred_region
        %s610 = ssub.s32 %s24, 2
        // Predicated region
        $region65: #{tpu_custom_call.1} parent=63 // pred_check
          %p611 = pneg %p179
        $region66: #{tpu_custom_call.1} parent=63 // pred_check_branch
          %613 = sbr.rel (%p611) target = $region68
        $region67: #{tpu_custom_call.1} parent=63 // pred_region
          %s614 = sand.u32 %s164, 1
          %s615 = scalar_lea.sflag [#allocation4], %s614
          %s616 = sand.u32 %s164, 1
          %s617 = smul.addr %s616, 16
          %s618 = scalar_lea.vmem [#allocation7], %s617
          %619 = dma.done %s615, 256
        $region68: #{tpu_custom_call.1} parent=63 // pred_fallthru
          _
        // Predicated region
        $region69: #{tpu_custom_call.1} parent=63 // pred_check
          %p620 = pneg %p207
        $region70: #{tpu_custom_call.1} parent=63 // pred_check_branch
          %622 = sbr.rel (%p620) target = $region72
        $region71: #{tpu_custom_call.1} parent=63 // pred_region
          %s623 = sand.u32 %s30, 1
          %s624 = scalar_lea.sflag [#allocation9], %s623
          %s625 = sand.u32 %s192, 1
          %s626 = smul.addr %s625, 16
          %s627 = scalar_lea.vmem [#allocation8], %s626
          %628 = dma.done %s624, 256
        $region72: #{tpu_custom_call.1} parent=63 // pred_fallthru
          _
        // Predicated region
        $region73: #{tpu_custom_call.1} parent=63 // pred_check
          %p629 = pneg %p235
        $region74: #{tpu_custom_call.1} parent=63 // pred_check_branch
          %631 = sbr.rel (%p629) target = $region76
        $region75: #{tpu_custom_call.1} parent=63 // pred_region
          %s632 = sand.u32 %s30, 1
          %s633 = scalar_lea.sflag [#allocation9], %s632
          %s634 = sand.u32 %s220, 1
          %s635 = smul.addr %s634, 16
          %s636 = scalar_lea.vmem [#allocation10], %s635
          %637 = dma.done %s633, 256
        $region76: #{tpu_custom_call.1} parent=63 // pred_fallthru
          _
      $region64: #{tpu_custom_call.1} parent=5 // pred_fallthru
        _
    $region6: #{tpu_custom_call.1} parent=1 // loop_footer
      %s28 = sadd.s32 1, %s24
    $region7: #{tpu_custom_call.1} parent=1 // loop_footer_branch
      %23 = sbr.rel target = $region3
    $region8: #{tpu_custom_call.1} parent=1 // loop_exit
      _
    %638 = vsyncpa [#allocation3], 1
    %s639 = scalar_lea.sflag [#allocation3], 1
    %640 = vsyncpa %s639, 1
    %641 = vsyncpa [#allocation6], 1
    %642 = vsyncpa [#allocation4], 1
    %s643 = scalar_lea.sflag [#allocation4], 1
    %644 = vsyncpa %s643, 1
    %645 = vsyncpa [#allocation9], 1
    %s646 = scalar_lea.sflag [#allocation9], 1
    %647 = vsyncpa %s646, 1

</llo_original>
